<compile_context>
chip_gen: v5e
topology: v5e:2x2
jax: 0.10.0
libtpu: 0.0.40
codegen_flags: <defaults>
</compile_context>

<pallas_src>
import math
import numpy as np
import jax
import jax.numpy as jnp
from jax.experimental import pallas as pl
from jax.experimental.pallas import tpu as pltpu

# ----- config (small, consistent with the module) ------------------------------
B, S, D = 2, 8, 64          # batch, seq_len (= max_seq_len), dim
NH, NKV = 4, 2              # n_heads, n_kv_heads
HD = D // NH                # head_dim = 16
HD2 = HD // 2               # 8
NREP = NH // NKV            # 2
BS = B * S                  # 16 flattened (batch, pos) rows
NQK = NH * BS               # 64 rows per q / k slab (heads on sublanes)
MULTIPLE_OF = 64
HIDDEN = MULTIPLE_OF * ((int(2 * (4 * D) / 3) + MULTIPLE_OF - 1) // MULTIPLE_OF)  # 192
HPAD = 256                  # hidden padded so the fused w1|w3 split is lane-tile aligned
EPS = 1e-5
SCALE = 1.0 / math.sqrt(HD)
NEG = -1e30                 # large finite negative: NaN-robust masking
# dropout = 0.0 -> attn/resid/ffn dropouts are identity; use_cache=False -> past_kv is None.


# ----- Pallas kernel ------------------------------------------------------------
def _block_kernel(x_ref, cos_ref, sin_ref, mask_ref, wqkv_ref, wo_ref,
                  an_ref, fn_ref, w13_ref, w2_ref, out_ref):
    x = x_ref[...]                                            # (BS, D) f32

    def rmsnorm(v, w):
        ms = jnp.mean(v * v, axis=-1, keepdims=True)
        return w * (v * jax.lax.rsqrt(ms + EPS))

    # ---- attention ----
    xn = rmsnorm(x, an_ref[...])                                              # (BS, D)
    xqkv = jnp.dot(xn.astype(jnp.bfloat16), wqkv_ref[...],
                   preferred_element_type=jnp.float32)                        # (BS, 3*D) = (16,192)

    # One relayout: q|k|v head blocks moved from lanes to sublanes -> (192, 16)
    slab = jnp.concatenate([xqkv[:, t * HD:(t + 1) * HD] for t in range(3 * NH)],
                           axis=0)                                            # (3*NH*BS, HD)

    # RoPE on all q+k rows at once: single half-width roll + one FMA pair.
    # cos_ref = [cos|cos], sin_ref = [-sin|+sin] per row (per-head [real|imag] layout).
    qk = slab[:2 * NQK]                                                       # (128, 16)
    qk = qk * cos_ref[...] + pltpu.roll(qk, HD2, axis=1) * sin_ref[...]
    qs = qk[:NQK]                                                             # (64, 16)
    ks = qk[NQK:]                                                             # (64, 16) (GQA repeat baked in wqkv)
    vs = slab[2 * NQK:]                                                       # (64, 16)

    # Block-diagonal attention: one score matmul, 2-D softmax, one PV matmul.
    s = jax.lax.dot_general(qs.astype(jnp.bfloat16), ks.astype(jnp.bfloat16),
                            (((1,), (1,)), ((), ())),
                            preferred_element_type=jnp.float32) * SCALE       # (64, 64)
    s = s + mask_ref[...]              # head-block-diagonal + same-batch + causal bias (0 / -1e30)
    m = jnp.max(s, axis=-1, keepdims=True)
    e = jnp.exp(s - m)
    p = e * pl.reciprocal(jnp.sum(e, axis=-1, keepdims=True), approx=True)    # softmax (f32)
    o_slab = jnp.dot(p.astype(jnp.bfloat16), vs.astype(jnp.bfloat16),
                     preferred_element_type=jnp.float32)                      # (64, 16)
    # relayout back: heads from sublanes to lanes -> (BS, D)
    o = jnp.concatenate([o_slab[h * BS:(h + 1) * BS] for h in range(NH)], axis=1)

    attn = jnp.dot(o.astype(jnp.bfloat16), wo_ref[...],
                   preferred_element_type=jnp.float32)
    res = x + attn                                                            # residual 1

    # ---- feed forward (SwiGLU) ----
    hn = rmsnorm(res, fn_ref[...])
    a13 = jnp.dot(hn.astype(jnp.bfloat16), w13_ref[...],
                  preferred_element_type=jnp.float32)                         # (BS, 2*HPAD)
    a1, a3 = a13[:, :HPAD], a13[:, HPAD:]                                     # 128-lane-aligned split
    gated = (a1 * jax.nn.sigmoid(a1)) * a3                                    # silu(w1 x) * (w3 x)
    ffn = jnp.dot(gated.astype(jnp.bfloat16), w2_ref[...],
                  preferred_element_type=jnp.float32)                         # (BS, D)

    out_ref[...] = res + ffn                                                  # residual 2


# ----- wrapper ------------------------------------------------------------------
def spongebob_block(x, params):
    """x: (B,S,D) f32; params: precomputed (cos2, sin2, mask, wqkv, wo, an, fn, w13, w2p)."""
    x2 = x.reshape(BS, D)
    args = (x2,) + tuple(params)
    grid_spec = pltpu.PrefetchScalarGridSpec(
        num_scalar_prefetch=0,
        grid=(1,),  # whole block in one step: per-step overhead dwarfs compute at this size
        in_specs=[pl.BlockSpec(a.shape, lambda i, _nd=a.ndim: (0,) * _nd) for a in args],
        out_specs=pl.BlockSpec((BS, D), lambda i: (0, 0)),
    )
    out = pl.pallas_call(
        _block_kernel,
        out_shape=jax.ShapeDtypeStruct((BS, D), jnp.float32),
        grid_spec=grid_spec,
        compiler_params=pltpu.CompilerParams(dimension_semantics=("arbitrary",)),
    )(*args)
    return out.reshape(B, S, D)


# ----- pure-JAX reference (mirrors the PyTorch forward exactly) -------------------
def reference(x, cos, sin, wq, wk, wv, wo, an, fn, w1, w2, w3):
    def rmsnorm(v, w):
        return w * (v * jax.lax.rsqrt(jnp.mean(v * v, -1, keepdims=True) + EPS))

    def rope_interleaved(t):   # t: (B, S, H, HD), interleaved (real, imag) pairs
        tr, ti = t[..., 0::2], t[..., 1::2]
        c, s = cos[None, :, None, :], sin[None, :, None, :]
        return jnp.stack([tr * c - ti * s, tr * s + ti * c], axis=-1).reshape(t.shape)

    xn = rmsnorm(x, an)
    xq = (xn @ wq).reshape(B, S, NH, HD)
    xk = (xn @ wk).reshape(B, S, NKV, HD)
    xv = (xn @ wv).reshape(B, S, NKV, HD)
    xq, xk = rope_interleaved(xq), rope_interleaved(xk)
    xk = jnp.repeat(xk, NREP, axis=2)
    xv = jnp.repeat(xv, NREP, axis=2)
    q, k, v = (xq.transpose(0, 2, 1, 3), xk.transpose(0, 2, 1, 3), xv.transpose(0, 2, 1, 3))
    scores = (q @ k.transpose(0, 1, 3, 2)) * SCALE
    scores = scores + jnp.triu(jnp.full((S, S), -jnp.inf, jnp.float32), k=1)[None, None]
    p = jax.nn.softmax(scores, axis=-1)
    o = (p @ v).transpose(0, 2, 1, 3).reshape(B, S, D)
    h = x + o @ wo
    hn = rmsnorm(h, fn)
    return h + (jax.nn.silu(hn @ w1) * (hn @ w3)) @ w2


if __name__ == "__main__":
    key = jax.random.PRNGKey(0)
    ks = jax.random.split(key, 10)
    init = lambda k, shape: (0.02 * jax.random.normal(k, shape)).astype(jnp.float32)

    x = jax.random.normal(ks[0], (B, S, D), jnp.float32)
    wq = init(ks[1], (D, NH * HD))
    wk = init(ks[2], (D, NKV * HD))
    wv = init(ks[3], (D, NKV * HD))
    wo = init(ks[4], (D, D))
    w1 = init(ks[5], (D, HIDDEN))
    w2 = init(ks[6], (HIDDEN, D))
    w3 = init(ks[7], (D, HIDDEN))
    an = (1.0 + 0.1 * jax.random.normal(ks[8], (D,))).astype(jnp.float32)
    fn = (1.0 + 0.1 * jax.random.normal(ks[9], (D,))).astype(jnp.float32)

    # pos_cis = exp(i * t * freqs) -> cos/sin tables of shape (S, HD//2)
    freqs_np = 1.0 / (10000.0 ** (np.arange(0, HD, 2, dtype=np.float32) / HD))
    angles_np = np.arange(S, dtype=np.float32)[:, None] * freqs_np[None, :]
    cos_np, sin_np = np.cos(angles_np), np.sin(angles_np)            # (S, HD2)
    cos, sin = jnp.asarray(cos_np), jnp.asarray(sin_np)

    # ---- precomputed kernel constants (built ONCE, outside the call path) ----
    # RoPE cos/sin slabs for the (q|k) head-major rows: row = blk*BS + b*S + i.
    cs = np.concatenate([cos_np, cos_np], axis=1)                    # (S, HD)  [cos | cos]
    ss = np.concatenate([-sin_np, sin_np], axis=1)                   # (S, HD)  [-sin | +sin]
    cos2 = jnp.asarray(np.tile(cs, (2 * NQK // S, 1)), jnp.float32)  # (128, HD)
    sin2 = jnp.asarray(np.tile(ss, (2 * NQK // S, 1)), jnp.float32)  # (128, HD)

    # Attention bias: 0 where (same head block & same batch & key pos <= query pos), else -1e30.
    n = np.arange(NQK)
    hb, rr = n // BS, n % BS
    bb, ii = rr // S, rr % S
    valid = (hb[:, None] == hb[None, :]) & (bb[:, None] == bb[None, :]) & (ii[None, :] <= ii[:, None])
    mask = jnp.asarray(np.where(valid, 0.0, NEG).astype(np.float32))          # (64, 64)

    # De-interleave q/k projection columns per head (even dims -> real half, odd -> imag half).
    # q.k^T is invariant to applying the same per-head permutation to q and k.
    perm = np.concatenate([np.arange(0, HD, 2), np.arange(1, HD, 2)])

    def permute_heads(w, nheads):
        cols = np.concatenate([h * HD + perm for h in range(nheads)])
        return jnp.take(w, jnp.asarray(cols), axis=1)

    wq_p = permute_heads(wq, NH)                                              # (D, 64)
    wk_p = permute_heads(wk, NKV)                                             # (D, 32)
    # Bake the GQA repeat (head h -> kv head h // NREP) into the k/v projection columns.
    wk_rep = jnp.repeat(wk_p.reshape(D, NKV, HD), NREP, axis=1).reshape(D, NH * HD)   # (D, 64)
    wv_rep = jnp.repeat(wv.reshape(D, NKV, HD), NREP, axis=1).reshape(D, NH * HD)     # (D, 64)
    wqkv = jnp.concatenate([wq_p, wk_rep, wv_rep], axis=1)                    # (D, 192)

    pad_c = jnp.zeros((D, HPAD - HIDDEN), jnp.float32)
    w13 = jnp.concatenate([w1, pad_c, w3, pad_c], axis=1)                     # (D, 512)
    w2p = jnp.concatenate([w2, jnp.zeros((HPAD - HIDDEN, D), jnp.float32)], axis=0)    # (256, D)

    params = (cos2, sin2, mask,
              wqkv.astype(jnp.bfloat16), wo.astype(jnp.bfloat16),
              an.reshape(1, D), fn.reshape(1, D),
              w13.astype(jnp.bfloat16), w2p.astype(jnp.bfloat16))

    out = jax.block_until_ready(spongebob_block(x, params))

    ref = reference(x, cos, sin, wq, wk, wv, wo, an, fn, w1, w2, w3)
    max_err = float(jnp.max(jnp.abs(out - ref)))
    assert jnp.allclose(out, ref, atol=2e-2, rtol=2e-2), f"max abs err {max_err}"

    # past_kv: use_cache=False in this forward, so past_kv is None (not returned).
    print("KERNEL_OK")
</pallas_src>

<mosaic_0001>
module attributes {stable_mosaic.version = 11 : i64} {
  func.func @_block_kernel(%arg0: i32, %arg1: memref<16x64xf32, #tpu.memory_space<vmem>>, %arg2: memref<128x16xf32, #tpu.memory_space<vmem>>, %arg3: memref<128x16xf32, #tpu.memory_space<vmem>>, %arg4: memref<64x64xf32, #tpu.memory_space<vmem>>, %arg5: memref<64x192xbf16, #tpu.memory_space<vmem>>, %arg6: memref<64x64xbf16, #tpu.memory_space<vmem>>, %arg7: memref<1x64xf32, #tpu.memory_space<vmem>>, %arg8: memref<1x64xf32, #tpu.memory_space<vmem>>, %arg9: memref<64x512xbf16, #tpu.memory_space<vmem>>, %arg10: memref<256x64xbf16, #tpu.memory_space<vmem>>, %arg11: memref<16x64xf32, #tpu.memory_space<vmem>>) attributes {dimension_semantics = [#tpu.dimension_semantics<arbitrary>], iteration_bounds = array<i64: 1>, scalar_prefetch = 0 : i64, scratch_operands = 0 : i64, tpu.core_type = #tpu.core_type<tc>, window_params = [{pipeline_mode = #tpu.pipeline_mode<synchronous>, transform_indices = @transform_0, window_bounds = array<i64: 16, 64>}, {pipeline_mode = #tpu.pipeline_mode<synchronous>, transform_indices = @transform_1, window_bounds = array<i64: 128, 16>}, {pipeline_mode = #tpu.pipeline_mode<synchronous>, transform_indices = @transform_2, window_bounds = array<i64: 128, 16>}, {pipeline_mode = #tpu.pipeline_mode<synchronous>, transform_indices = @transform_3, window_bounds = array<i64: 64, 64>}, {pipeline_mode = #tpu.pipeline_mode<synchronous>, transform_indices = @transform_4, window_bounds = array<i64: 64, 192>}, {pipeline_mode = #tpu.pipeline_mode<synchronous>, transform_indices = @transform_5, window_bounds = array<i64: 64, 64>}, {pipeline_mode = #tpu.pipeline_mode<synchronous>, transform_indices = @transform_6, window_bounds = array<i64: 1, 64>}, {pipeline_mode = #tpu.pipeline_mode<synchronous>, transform_indices = @transform_7, window_bounds = array<i64: 1, 64>}, {pipeline_mode = #tpu.pipeline_mode<synchronous>, transform_indices = @transform_8, window_bounds = array<i64: 64, 512>}, {pipeline_mode = #tpu.pipeline_mode<synchronous>, transform_indices = @transform_9, window_bounds = array<i64: 256, 64>}, {pipeline_mode = #tpu.pipeline_mode<synchronous>, transform_indices = @transform_10, window_bounds = array<i64: 16, 64>}]} {
    %c0 = arith.constant 0 : index
    %c0_0 = arith.constant 0 : index
    %0 = vector.load %arg1[%c0, %c0_0] : memref<16x64xf32, #tpu.memory_space<vmem>>, vector<16x64xf32>
    %c0_1 = arith.constant 0 : index
    %c0_2 = arith.constant 0 : index
    %1 = vector.load %arg7[%c0_1, %c0_2] : memref<1x64xf32, #tpu.memory_space<vmem>>, vector<1x64xf32>
    %2 = arith.mulf %0, %0 : vector<16x64xf32>
    %cst = arith.constant dense<0.000000e+00> : vector<16xf32>
    %3 = vector.multi_reduction <add>, %2, %cst [1] : vector<16x64xf32> to vector<16xf32>
    %4 = vector.shape_cast %3 : vector<16xf32> to vector<16x1xf32>
    %cst_3 = arith.constant 6.400000e+01 : f32
    %5 = vector.broadcast %cst_3 : f32 to vector<16x1xf32>
    %6 = arith.divf %4, %5 : vector<16x1xf32>
    %cst_4 = arith.constant 9.99999974E-6 : f32
    %7 = vector.broadcast %cst_4 : f32 to vector<16x1xf32>
    %8 = arith.addf %6, %7 : vector<16x1xf32>
    %9 = math.rsqrt %8 : vector<16x1xf32>
    %10 = vector.broadcast %9 : vector<16x1xf32> to vector<16x64xf32>
    %11 = arith.mulf %0, %10 : vector<16x64xf32>
    %12 = vector.broadcast %1 : vector<1x64xf32> to vector<16x64xf32>
    %13 = arith.mulf %12, %11 : vector<16x64xf32>
    %14 = arith.truncf %13 : vector<16x64xf32> to vector<16x64xbf16>
    %c0_5 = arith.constant 0 : index
    %c0_6 = arith.constant 0 : index
    %15 = vector.load %arg5[%c0_5, %c0_6] : memref<64x192xbf16, #tpu.memory_space<vmem>>, vector<64x192xbf16>
    %cst_7 = arith.constant dense<0.000000e+00> : vector<16x192xf32>
    %16 = tpu.matmul %14, %15, %cst_7 {dimension_numbers = #tpu.dot_dimension_numbers<[1], [0], [0], [1], [0, 0, 1, 1], [], []>} : vector<16x64xbf16>, vector<64x192xbf16>, vector<16x192xf32> -> vector<16x192xf32>
    %17 = vector.extract_strided_slice %16 {offsets = [0, 0], sizes = [16, 16], strides = [1, 1]} : vector<16x192xf32> to vector<16x16xf32>
    %18 = vector.extract_strided_slice %16 {offsets = [0, 16], sizes = [16, 16], strides = [1, 1]} : vector<16x192xf32> to vector<16x16xf32>
    %19 = vector.extract_strided_slice %16 {offsets = [0, 32], sizes = [16, 16], strides = [1, 1]} : vector<16x192xf32> to vector<16x16xf32>
    %20 = vector.extract_strided_slice %16 {offsets = [0, 48], sizes = [16, 16], strides = [1, 1]} : vector<16x192xf32> to vector<16x16xf32>
    %21 = vector.extract_strided_slice %16 {offsets = [0, 64], sizes = [16, 16], strides = [1, 1]} : vector<16x192xf32> to vector<16x16xf32>
    %22 = vector.extract_strided_slice %16 {offsets = [0, 80], sizes = [16, 16], strides = [1, 1]} : vector<16x192xf32> to vector<16x16xf32>
    %23 = vector.extract_strided_slice %16 {offsets = [0, 96], sizes = [16, 16], strides = [1, 1]} : vector<16x192xf32> to vector<16x16xf32>
    %24 = vector.extract_strided_slice %16 {offsets = [0, 112], sizes = [16, 16], strides = [1, 1]} : vector<16x192xf32> to vector<16x16xf32>
    %25 = vector.extract_strided_slice %16 {offsets = [0, 128], sizes = [16, 16], strides = [1, 1]} : vector<16x192xf32> to vector<16x16xf32>
    %26 = vector.extract_strided_slice %16 {offsets = [0, 144], sizes = [16, 16], strides = [1, 1]} : vector<16x192xf32> to vector<16x16xf32>
    %27 = vector.extract_strided_slice %16 {offsets = [0, 160], sizes = [16, 16], strides = [1, 1]} : vector<16x192xf32> to vector<16x16xf32>
    %28 = vector.extract_strided_slice %16 {offsets = [0, 176], sizes = [16, 16], strides = [1, 1]} : vector<16x192xf32> to vector<16x16xf32>
    %29 = tpu.concatenate %17, %18, %19, %20, %21, %22, %23, %24, %25, %26, %27, %28 in 0 : vector<16x16xf32>, vector<16x16xf32>, vector<16x16xf32>, vector<16x16xf32>, vector<16x16xf32>, vector<16x16xf32>, vector<16x16xf32>, vector<16x16xf32>, vector<16x16xf32>, vector<16x16xf32>, vector<16x16xf32>, vector<16x16xf32> -> vector<192x16xf32>
    %30 = vector.extract_strided_slice %29 {offsets = [0, 0], sizes = [128, 16], strides = [1, 1]} : vector<192x16xf32> to vector<128x16xf32>
    %c0_8 = arith.constant 0 : index
    %c0_9 = arith.constant 0 : index
    %31 = vector.load %arg2[%c0_8, %c0_9] : memref<128x16xf32, #tpu.memory_space<vmem>>, vector<128x16xf32>
    %32 = arith.mulf %30, %31 : vector<128x16xf32>
    %c8_i32 = arith.constant 8 : i32
    %33 = tpu.dynamic_rotate %30 by %c8_i32 dim 1 : vector<128x16xf32>, i32 -> vector<128x16xf32>
    %c0_10 = arith.constant 0 : index
    %c0_11 = arith.constant 0 : index
    %34 = vector.load %arg3[%c0_10, %c0_11] : memref<128x16xf32, #tpu.memory_space<vmem>>, vector<128x16xf32>
    %35 = arith.mulf %33, %34 : vector<128x16xf32>
    %36 = arith.addf %32, %35 : vector<128x16xf32>
    %37 = vector.extract_strided_slice %36 {offsets = [0, 0], sizes = [64, 16], strides = [1, 1]} : vector<128x16xf32> to vector<64x16xf32>
    %38 = vector.extract_strided_slice %36 {offsets = [64, 0], sizes = [64, 16], strides = [1, 1]} : vector<128x16xf32> to vector<64x16xf32>
    %39 = vector.extract_strided_slice %29 {offsets = [128, 0], sizes = [64, 16], strides = [1, 1]} : vector<192x16xf32> to vector<64x16xf32>
    %40 = arith.truncf %37 : vector<64x16xf32> to vector<64x16xbf16>
    %41 = arith.truncf %38 : vector<64x16xf32> to vector<64x16xbf16>
    %cst_12 = arith.constant dense<0.000000e+00> : vector<64x64xf32>
    %42 = tpu.matmul %40, %41, %cst_12 {dimension_numbers = #tpu.dot_dimension_numbers<[1], [1], [0], [0], [0, 0, 1, 0], [], []>} : vector<64x16xbf16>, vector<64x16xbf16>, vector<64x64xf32> -> vector<64x64xf32>
    %cst_13 = arith.constant 2.500000e-01 : f32
    %43 = vector.broadcast %cst_13 : f32 to vector<64x64xf32>
    %44 = arith.mulf %42, %43 : vector<64x64xf32>
    %c0_14 = arith.constant 0 : index
    %c0_15 = arith.constant 0 : index
    %45 = vector.load %arg4[%c0_14, %c0_15] : memref<64x64xf32, #tpu.memory_space<vmem>>, vector<64x64xf32>
    %46 = arith.addf %44, %45 : vector<64x64xf32>
    %cst_16 = arith.constant dense<0xFF800000> : vector<64xf32>
    %47 = vector.multi_reduction <maximumf>, %46, %cst_16 [1] : vector<64x64xf32> to vector<64xf32>
    %48 = vector.shape_cast %47 : vector<64xf32> to vector<64x1xf32>
    %49 = vector.broadcast %48 : vector<64x1xf32> to vector<64x64xf32>
    %50 = arith.subf %46, %49 : vector<64x64xf32>
    %51 = math.exp %50 : vector<64x64xf32>
    %cst_17 = arith.constant dense<0.000000e+00> : vector<64xf32>
    %52 = vector.multi_reduction <add>, %51, %cst_17 [1] : vector<64x64xf32> to vector<64xf32>
    %53 = vector.shape_cast %52 : vector<64xf32> to vector<64x1xf32>
    %54 = tpu.reciprocal %53 {approx = true} : vector<64x1xf32> -> vector<64x1xf32>
    %55 = vector.broadcast %54 : vector<64x1xf32> to vector<64x64xf32>
    %56 = arith.mulf %51, %55 : vector<64x64xf32>
    %57 = arith.truncf %56 : vector<64x64xf32> to vector<64x64xbf16>
    %58 = arith.truncf %39 : vector<64x16xf32> to vector<64x16xbf16>
    %cst_18 = arith.constant dense<0.000000e+00> : vector<64x16xf32>
    %59 = tpu.matmul %57, %58, %cst_18 {dimension_numbers = #tpu.dot_dimension_numbers<[1], [0], [0], [1], [0, 0, 1, 1], [], []>} : vector<64x64xbf16>, vector<64x16xbf16>, vector<64x16xf32> -> vector<64x16xf32>
    %60 = vector.extract_strided_slice %59 {offsets = [0, 0], sizes = [16, 16], strides = [1, 1]} : vector<64x16xf32> to vector<16x16xf32>
    %61 = vector.extract_strided_slice %59 {offsets = [16, 0], sizes = [16, 16], strides = [1, 1]} : vector<64x16xf32> to vector<16x16xf32>
    %62 = vector.extract_strided_slice %59 {offsets = [32, 0], sizes = [16, 16], strides = [1, 1]} : vector<64x16xf32> to vector<16x16xf32>
    %63 = vector.extract_strided_slice %59 {offsets = [48, 0], sizes = [16, 16], strides = [1, 1]} : vector<64x16xf32> to vector<16x16xf32>
    %64 = tpu.concatenate %60, %61, %62, %63 in 1 : vector<16x16xf32>, vector<16x16xf32>, vector<16x16xf32>, vector<16x16xf32> -> vector<16x64xf32>
    %65 = arith.truncf %64 : vector<16x64xf32> to vector<16x64xbf16>
    %c0_19 = arith.constant 0 : index
    %c0_20 = arith.constant 0 : index
    %66 = vector.load %arg6[%c0_19, %c0_20] : memref<64x64xbf16, #tpu.memory_space<vmem>>, vector<64x64xbf16>
    %cst_21 = arith.constant dense<0.000000e+00> : vector<16x64xf32>
    %67 = tpu.matmul %65, %66, %cst_21 {dimension_numbers = #tpu.dot_dimension_numbers<[1], [0], [0], [1], [0, 0, 1, 1], [], []>} : vector<16x64xbf16>, vector<64x64xbf16>, vector<16x64xf32> -> vector<16x64xf32>
    %68 = arith.addf %0, %67 : vector<16x64xf32>
    %c0_22 = arith.constant 0 : index
    %c0_23 = arith.constant 0 : index
    %69 = vector.load %arg8[%c0_22, %c0_23] : memref<1x64xf32, #tpu.memory_space<vmem>>, vector<1x64xf32>
    %70 = arith.mulf %68, %68 : vector<16x64xf32>
    %cst_24 = arith.constant dense<0.000000e+00> : vector<16xf32>
    %71 = vector.multi_reduction <add>, %70, %cst_24 [1] : vector<16x64xf32> to vector<16xf32>
    %72 = vector.shape_cast %71 : vector<16xf32> to vector<16x1xf32>
    %cst_25 = arith.constant 6.400000e+01 : f32
    %73 = vector.broadcast %cst_25 : f32 to vector<16x1xf32>
    %74 = arith.divf %72, %73 : vector<16x1xf32>
    %cst_26 = arith.constant 9.99999974E-6 : f32
    %75 = vector.broadcast %cst_26 : f32 to vector<16x1xf32>
    %76 = arith.addf %74, %75 : vector<16x1xf32>
    %77 = math.rsqrt %76 : vector<16x1xf32>
    %78 = vector.broadcast %77 : vector<16x1xf32> to vector<16x64xf32>
    %79 = arith.mulf %68, %78 : vector<16x64xf32>
    %80 = vector.broadcast %69 : vector<1x64xf32> to vector<16x64xf32>
    %81 = arith.mulf %80, %79 : vector<16x64xf32>
    %82 = arith.truncf %81 : vector<16x64xf32> to vector<16x64xbf16>
    %c0_27 = arith.constant 0 : index
    %c0_28 = arith.constant 0 : index
    %83 = vector.load %arg9[%c0_27, %c0_28] : memref<64x512xbf16, #tpu.memory_space<vmem>>, vector<64x512xbf16>
    %cst_29 = arith.constant dense<0.000000e+00> : vector<16x512xf32>
    %84 = tpu.matmul %82, %83, %cst_29 {dimension_numbers = #tpu.dot_dimension_numbers<[1], [0], [0], [1], [0, 0, 1, 1], [], []>} : vector<16x64xbf16>, vector<64x512xbf16>, vector<16x512xf32> -> vector<16x512xf32>
    %85 = vector.extract_strided_slice %84 {offsets = [0, 0], sizes = [16, 256], strides = [1, 1]} : vector<16x512xf32> to vector<16x256xf32>
    %86 = vector.extract_strided_slice %84 {offsets = [0, 256], sizes = [16, 256], strides = [1, 1]} : vector<16x512xf32> to vector<16x256xf32>
    %87 = arith.negf %85 : vector<16x256xf32>
    %88 = math.exp %87 : vector<16x256xf32>
    %cst_30 = arith.constant 1.000000e+00 : f32
    %89 = vector.broadcast %cst_30 : f32 to vector<16x256xf32>
    %90 = arith.addf %89, %88 : vector<16x256xf32>
    %91 = arith.divf %89, %90 : vector<16x256xf32>
    %92 = arith.mulf %85, %91 : vector<16x256xf32>
    %93 = arith.mulf %92, %86 : vector<16x256xf32>
    %94 = arith.truncf %93 : vector<16x256xf32> to vector<16x256xbf16>
    %c0_31 = arith.constant 0 : index
    %c0_32 = arith.constant 0 : index
    %95 = vector.load %arg10[%c0_31, %c0_32] : memref<256x64xbf16, #tpu.memory_space<vmem>>, vector<256x64xbf16>
    %cst_33 = arith.constant dense<0.000000e+00> : vector<16x64xf32>
    %96 = tpu.matmul %94, %95, %cst_33 {dimension_numbers = #tpu.dot_dimension_numbers<[1], [0], [0], [1], [0, 0, 1, 1], [], []>} : vector<16x256xbf16>, vector<256x64xbf16>, vector<16x64xf32> -> vector<16x64xf32>
    %97 = arith.addf %68, %96 : vector<16x64xf32>
    %c0_34 = arith.constant 0 : index
    %c0_35 = arith.constant 0 : index
    %98 = vector.load %arg11[%c0_34, %c0_35] : memref<16x64xf32, #tpu.memory_space<vmem>>, vector<16x64xf32>
    tpu.vector_store %arg11[%c0_34, %c0_35], %97 {strides = array<i32>} : memref<16x64xf32, #tpu.memory_space<vmem>>, vector<16x64xf32>,
    return
  }
  func.func @transform_0(%arg0: i32) -> (i32, i32) {
    %c0_i32 = arith.constant 0 : i32
    %c0_i32_0 = arith.constant 0 : i32
    %c0_i32_1 = arith.constant 0 : i32
    return %c0_i32, %c0_i32_0 : i32, i32
  }
  func.func @transform_1(%arg0: i32) -> (i32, i32) {
    %c0_i32 = arith.constant 0 : i32
    %c0_i32_0 = arith.constant 0 : i32
    %c0_i32_1 = arith.constant 0 : i32
    return %c0_i32, %c0_i32_0 : i32, i32
  }
  func.func @transform_2(%arg0: i32) -> (i32, i32) {
    %c0_i32 = arith.constant 0 : i32
    %c0_i32_0 = arith.constant 0 : i32
    %c0_i32_1 = arith.constant 0 : i32
    return %c0_i32, %c0_i32_0 : i32, i32
  }
  func.func @transform_3(%arg0: i32) -> (i32, i32) {
    %c0_i32 = arith.constant 0 : i32
    %c0_i32_0 = arith.constant 0 : i32
    %c0_i32_1 = arith.constant 0 : i32
    return %c0_i32, %c0_i32_0 : i32, i32
  }
  func.func @transform_4(%arg0: i32) -> (i32, i32) {
    %c0_i32 = arith.constant 0 : i32
    %c0_i32_0 = arith.constant 0 : i32
    %c0_i32_1 = arith.constant 0 : i32
    return %c0_i32, %c0_i32_0 : i32, i32
  }
  func.func @transform_5(%arg0: i32) -> (i32, i32) {
    %c0_i32 = arith.constant 0 : i32
    %c0_i32_0 = arith.constant 0 : i32
    %c0_i32_1 = arith.constant 0 : i32
    return %c0_i32, %c0_i32_0 : i32, i32
  }
  func.func @transform_6(%arg0: i32) -> (i32, i32) {
    %c0_i32 = arith.constant 0 : i32
    %c0_i32_0 = arith.constant 0 : i32
    %c0_i32_1 = arith.constant 0 : i32
    return %c0_i32, %c0_i32_0 : i32, i32
  }
  func.func @transform_7(%arg0: i32) -> (i32, i32) {
    %c0_i32 = arith.constant 0 : i32
    %c0_i32_0 = arith.constant 0 : i32
    %c0_i32_1 = arith.constant 0 : i32
    return %c0_i32, %c0_i32_0 : i32, i32
  }
  func.func @transform_8(%arg0: i32) -> (i32, i32) {
    %c0_i32 = arith.constant 0 : i32
    %c0_i32_0 = arith.constant 0 : i32
    %c0_i32_1 = arith.constant 0 : i32
    return %c0_i32, %c0_i32_0 : i32, i32
  }
  func.func @transform_9(%arg0: i32) -> (i32, i32) {
    %c0_i32 = arith.constant 0 : i32
    %c0_i32_0 = arith.constant 0 : i32
    %c0_i32_1 = arith.constant 0 : i32
    return %c0_i32, %c0_i32_0 : i32, i32
  }
  func.func @transform_10(%arg0: i32) -> (i32, i32) {
    %c0_i32 = arith.constant 0 : i32
    %c0_i32_0 = arith.constant 0 : i32
    %c0_i32_1 = arith.constant 0 : i32
    return %c0_i32, %c0_i32_0 : i32, i32
  }
}

</mosaic_0001>

<llo_original>
// kernel: tpu_custom_call.1
$region0: #{tpu_custom_call.1}
  #allocation0 [shape = 'u32[]', space=smem, size = 0x4, offset = 0x4, fixed_abs, tag = 'smem constant byte address 0x4 - core index']
  #allocation1 [shape = 'u32[72,128]{1,0:T(1,128)}', space=vmem, size = 0x9000, scoped, tag = 'internal scratch']
  %s0 = inlined_call_operand.vmem [shape: f32[16,64], index: 0, kind: input, shape index: {}]
  %s1 = inlined_call_operand.vmem [shape: f32[128,16], index: 1, kind: input, shape index: {}]
  %s2 = inlined_call_operand.vmem [shape: f32[128,16], index: 2, kind: input, shape index: {}]
  %s3 = inlined_call_operand.vmem [shape: f32[64,64], index: 3, kind: input, shape index: {}]
  %s4 = inlined_call_operand.vmem [shape: bf16[64,192], index: 4, kind: input, shape index: {}]
  %s5 = inlined_call_operand.vmem [shape: bf16[64,64], index: 5, kind: input, shape index: {}]
  %s6 = inlined_call_operand.vmem [shape: f32[1,64], index: 6, kind: input, shape index: {}]
  %s7 = inlined_call_operand.vmem [shape: f32[1,64], index: 7, kind: input, shape index: {}]
  %s8 = inlined_call_operand.vmem [shape: bf16[64,512], index: 8, kind: input, shape index: {}]
  %s9 = inlined_call_operand.vmem [shape: bf16[256,64], index: 9, kind: input, shape index: {}]
  %s10 = inlined_call_operand.hbm [shape: f32[16,64], index: 10, kind: output, shape index: {}]
  %s11 = sld [smem:[#allocation0]]
  $region50: #{tpu_custom_call.1} parent=0
    _
  %s13 = ssub.s32 1, %s11
  %s14 = scalar_select 0, %s13, %s11
  $region1: #{tpu_custom_call.1} parent=0
    #allocation2 [shape = 'u8[8192]{0}', space=vmem, size = 0x2000, scoped, tag = 'output window, operand 0, single buffered']
    #allocation3 [shape = 's32[1]{0}', space=sflag, size = 0x4, scoped, tag = 'scoped memory for tpu_custom_call.1']
    %15 = vsyncpa [#allocation3], 0
    // Predicated region
    $region2: #{tpu_custom_call.1} parent=1 // pred_check
      _
    $region3: #{tpu_custom_call.1} parent=1 // pred_check_branch
      %17 = sbr.rel (0) target = $region5
    $region4: #{tpu_custom_call.1} parent=1 // pred_region
      _
    $region5: #{tpu_custom_call.1} parent=1 // pred_fallthru
      _
    // Predicated region
    $region6: #{tpu_custom_call.1} parent=1 // pred_check
      _
    $region7: #{tpu_custom_call.1} parent=1 // pred_check_branch
      %19 = sbr.rel (0) target = $region9
    $region8: #{tpu_custom_call.1} parent=1 // pred_region
      _
    $region9: #{tpu_custom_call.1} parent=1 // pred_fallthru
      _
    // Predicated region
    $region10: #{tpu_custom_call.1} parent=1 // pred_check
      _
    $region11: #{tpu_custom_call.1} parent=1 // pred_check_branch
      %21 = sbr.rel (0) target = $region13
    $region12: #{tpu_custom_call.1} parent=1 // pred_region
      _
    $region13: #{tpu_custom_call.1} parent=1 // pred_fallthru
      _
    // Predicated region
    $region14: #{tpu_custom_call.1} parent=1 // pred_check
      _
    $region15: #{tpu_custom_call.1} parent=1 // pred_check_branch
      %23 = sbr.rel (0) target = $region17
    $region16: #{tpu_custom_call.1} parent=1 // pred_region
      _
    $region17: #{tpu_custom_call.1} parent=1 // pred_fallthru
      _
    // Predicated region
    $region18: #{tpu_custom_call.1} parent=1 // pred_check
      _
    $region19: #{tpu_custom_call.1} parent=1 // pred_check_branch
      %25 = sbr.rel (0) target = $region21
    $region20: #{tpu_custom_call.1} parent=1 // pred_region
      _
    $region21: #{tpu_custom_call.1} parent=1 // pred_fallthru
      _
    // Predicated region
    $region22: #{tpu_custom_call.1} parent=1 // pred_check
      _
    $region23: #{tpu_custom_call.1} parent=1 // pred_check_branch
      %27 = sbr.rel (0) target = $region25
    $region24: #{tpu_custom_call.1} parent=1 // pred_region
      _
    $region25: #{tpu_custom_call.1} parent=1 // pred_fallthru
      _
    // Predicated region
    $region26: #{tpu_custom_call.1} parent=1 // pred_check
      _
    $region27: #{tpu_custom_call.1} parent=1 // pred_check_branch
      %29 = sbr.rel (0) target = $region29
    $region28: #{tpu_custom_call.1} parent=1 // pred_region
      _
    $region29: #{tpu_custom_call.1} parent=1 // pred_fallthru
      _
    // Predicated region
    $region30: #{tpu_custom_call.1} parent=1 // pred_check
      _
    $region31: #{tpu_custom_call.1} parent=1 // pred_check_branch
      %31 = sbr.rel (0) target = $region33
    $region32: #{tpu_custom_call.1} parent=1 // pred_region
      _
    $region33: #{tpu_custom_call.1} parent=1 // pred_fallthru
      _
    // Predicated region
    $region34: #{tpu_custom_call.1} parent=1 // pred_check
      _
    $region35: #{tpu_custom_call.1} parent=1 // pred_check_branch
      %33 = sbr.rel (0) target = $region37
    $region36: #{tpu_custom_call.1} parent=1 // pred_region
      _
    $region37: #{tpu_custom_call.1} parent=1 // pred_fallthru
      _
    // Predicated region
    $region38: #{tpu_custom_call.1} parent=1 // pred_check
      _
    $region39: #{tpu_custom_call.1} parent=1 // pred_check_branch
      %35 = sbr.rel (0) target = $region41
    $region40: #{tpu_custom_call.1} parent=1 // pred_region
      _
    $region41: #{tpu_custom_call.1} parent=1 // pred_fallthru
      _
    %v37 = vld [vmem:[%s0] sm:$0xff]
    %v38 = vld [vmem:[%s0 + $0x8] sm:$0xff]
    %v39 = vld [vmem:[%s6] sm:$0x1]
    %v40 = vmul.f32 %v37, %v37
    %v41 = vmul.f32 %v38, %v38
    %vm42 = vcmask 523264
    %v43 = vsel %vm42, %v40, 0.0
    %44 = vadd.xlane.f32.xlu0 %v43
    %v45 = vpop.xlane.xlu0 %44
    %v46 = vsel %vm42, %v41, 0.0
    %47 = vadd.xlane.f32.xlu0 %v46
    %v48 = vpop.xlane.xlu0 %47
    %v49 = vrcp.pop 64.0
    %v50 = vmul.f32 64.0, %v49
    %v51 = vsub.f32 1.0, %v50
    %v52 = vmul.f32 %v49, %v51
    %v53 = vadd.f32 %v49, %v52
    %vm54 = vweird.f32 %v49
    %v55 = vsel %vm54, %v49, %v53
    %v56 = vmul.f32 %v45, %v55
    %v57 = vmul.f32 %v48, %v55
    %v58 = vadd.f32 %v56, 1e-05
    %v59 = vadd.f32 %v57, 1e-05
    %v60 = vrsqrt.pop %v58
    %v61 = vmul.f32 %v60, %v58
    %v62 = vmul.f32 %v61, %v60
    %v63 = vmul.f32 0.5, %v62
    %v64 = vsub.f32 1.5, %v63
    %v65 = vmul.f32 %v60, %v64
    %vm66 = vweird.f32 %v58
    %vm67 = vweird.f32 %v60
    %vm68 = vmor %vm66, %vm67
    %v69 = vsel %vm68, %v60, %v65
    %v70 = vrsqrt.pop %v59
    %v71 = vmul.f32 %v70, %v59
    %v72 = vmul.f32 %v71, %v70
    %v73 = vmul.f32 0.5, %v72
    %v74 = vsub.f32 1.5, %v73
    %v75 = vmul.f32 %v70, %v74
    %vm76 = vweird.f32 %v59
    %vm77 = vweird.f32 %v70
    %vm78 = vmor %vm76, %vm77
    %v79 = vsel %vm78, %v70, %v75
    %v80 = vmul.f32 %v37, %v69
    %v81 = vmul.f32 %v38, %v79
    %v83 = vperm.slane %v39, 0
    %v85 = vmul.f32 %v83, %v80
    %v86 = vmul.f32 %v83, %v81
    %v87 = vpack.c.bf16 %v86, %v85
    %v88 = vld [vmem:[%s4] sm:$0xff]
    %v89 = vld [vmem:[%s4 + $0x8] sm:$0xff]
    %v90 = vld [vmem:[%s4 + $0x10] sm:$0xff]
    %v91 = vld [vmem:[%s4 + $0x18] sm:$0xff]
    %v92 = vld [vmem:[%s4 + $0x20] sm:$0xff]
    %v93 = vld [vmem:[%s4 + $0x28] sm:$0xff]
    %v94 = vld [vmem:[%s4 + $0x30] sm:$0xff]
    %v95 = vld [vmem:[%s4 + $0x38] sm:$0xff]
    %v104 = vunpack.c.l.b16 %v88
    %v105 = vunpack.c.h.b16 %v88
    %v106 = vunpack.c.l.b16 %v89
    %v107 = vunpack.c.h.b16 %v89
    %v108 = vunpack.c.l.b16 %v90
    %v109 = vunpack.c.h.b16 %v90
    %v110 = vunpack.c.l.b16 %v91
    %v111 = vunpack.c.h.b16 %v91
    %v112 = vunpack.c.l.b16 %v92
    %v113 = vunpack.c.h.b16 %v92
    %v114 = vunpack.c.l.b16 %v93
    %v115 = vunpack.c.h.b16 %v93
    %v116 = vunpack.c.l.b16 %v94
    %v117 = vunpack.c.h.b16 %v94
    %v118 = vunpack.c.l.b16 %v95
    %v119 = vunpack.c.h.b16 %v95
    %v120 = vpack.c.b16 %v106, %v104
    %v121 = vpack.c.b16 %v107, %v105
    %v122 = vpack.c.b16 %v110, %v108
    %v123 = vpack.c.b16 %v111, %v109
    %v124 = vpack.c.b16 %v114, %v112
    %v125 = vpack.c.b16 %v115, %v113
    %v126 = vpack.c.b16 %v118, %v116
    %v127 = vpack.c.b16 %v119, %v117
    %v137 = vsel %vm42, %v87, 0
    %139 = vmatpush.bf16.msra.mxu0 0
    %140 = vmatpush.bf16.msra.mxu0 0
    %141 = vmatpush.bf16.msra.mxu0 0
    %142 = vmatpush.bf16.msra.mxu0 0
    %143 = vmatpush.bf16.msra.mxu0 %v126
    %144 = vmatpush.bf16.msra.mxu0 %v124
    %145 = vmatpush.bf16.msra.mxu0 %v122
    %146 = vmatpush.bf16.msra.mxu0 %v120
    %147 = vmatmul.bf16.gmra.mxu0 %v137
    %v148 = vpop.f32.mrf.mxu0
    %v149 = vadd.f32 0.0, %v148
    %v150 = vpop.f32.mrf.mxu0
    %v151 = vadd.f32 0.0, %v150
    %152 = vdwg.mxu0
    %153 = vmatpush.bf16.msra.mxu0 0
    %154 = vmatpush.bf16.msra.mxu0 0
    %155 = vmatpush.bf16.msra.mxu0 0
    %156 = vmatpush.bf16.msra.mxu0 0
    %157 = vmatpush.bf16.msra.mxu0 %v127
    %158 = vmatpush.bf16.msra.mxu0 %v125
    %159 = vmatpush.bf16.msra.mxu0 %v123
    %160 = vmatpush.bf16.msra.mxu0 %v121
    %161 = vmatmul.bf16.gmra.mxu0 %v137
    %v162 = vpop.f32.mrf.mxu0
    %v163 = vadd.f32 0.0, %v162
    %v164 = vpop.f32.mrf.mxu0
    %v165 = vadd.f32 0.0, %v164
    %166 = vdwg.mxu0
    %169 = vrot.lane.b32.xlu0 %v149, 112
    %v170 = vpop.permute.xlu0 %169
    %171 = vrot.lane.b32.xlu0 %v151, 112
    %v172 = vpop.permute.xlu0 %171
    %175 = vrot.lane.b32.xlu0 %v149, 96
    %v176 = vpop.permute.xlu0 %175
    %177 = vrot.lane.b32.xlu0 %v151, 96
    %v178 = vpop.permute.xlu0 %177
    %181 = vrot.lane.b32.xlu0 %v149, 80
    %v182 = vpop.permute.xlu0 %181
    %183 = vrot.lane.b32.xlu0 %v151, 80
    %v184 = vpop.permute.xlu0 %183
    %187 = vrot.lane.b32.xlu0 %v149, 64
    %v188 = vpop.permute.xlu0 %187
    %189 = vrot.lane.b32.xlu0 %v151, 64
    %v190 = vpop.permute.xlu0 %189
    %193 = vrot.lane.b32.xlu0 %v149, 48
    %v194 = vpop.permute.xlu0 %193
    %195 = vrot.lane.b32.xlu0 %v151, 48
    %v196 = vpop.permute.xlu0 %195
    %199 = vrot.lane.b32.xlu0 %v149, 32
    %v200 = vpop.permute.xlu0 %199
    %201 = vrot.lane.b32.xlu0 %v151, 32
    %v202 = vpop.permute.xlu0 %201
    %205 = vrot.lane.b32.xlu0 %v149, 16
    %v206 = vpop.permute.xlu0 %205
    %207 = vrot.lane.b32.xlu0 %v151, 16
    %v208 = vpop.permute.xlu0 %207
    %213 = vrot.lane.b32.xlu0 %v163, 112
    %v214 = vpop.permute.xlu0 %213
    %215 = vrot.lane.b32.xlu0 %v165, 112
    %v216 = vpop.permute.xlu0 %215
    %219 = vrot.lane.b32.xlu0 %v163, 96
    %v220 = vpop.permute.xlu0 %219
    %221 = vrot.lane.b32.xlu0 %v165, 96
    %v222 = vpop.permute.xlu0 %221
    %225 = vrot.lane.b32.xlu0 %v163, 80
    %v226 = vpop.permute.xlu0 %225
    %227 = vrot.lane.b32.xlu0 %v165, 80
    %v228 = vpop.permute.xlu0 %227
    %v231 = vld [vmem:[%s1] sm:$0xff]
    %v232 = vld [vmem:[%s1 + $0x8] sm:$0xff]
    %v233 = vld [vmem:[%s1 + $0x10] sm:$0xff]
    %v234 = vld [vmem:[%s1 + $0x18] sm:$0xff]
    %v235 = vld [vmem:[%s1 + $0x20] sm:$0xff]
    %v236 = vld [vmem:[%s1 + $0x28] sm:$0xff]
    %v237 = vld [vmem:[%s1 + $0x30] sm:$0xff]
    %v238 = vld [vmem:[%s1 + $0x38] sm:$0xff]
    %v239 = vld [vmem:[%s1 + $0x40] sm:$0xff]
    %v240 = vld [vmem:[%s1 + $0x48] sm:$0xff]
    %v241 = vld [vmem:[%s1 + $0x50] sm:$0xff]
    %v242 = vld [vmem:[%s1 + $0x58] sm:$0xff]
    %v243 = vld [vmem:[%s1 + $0x60] sm:$0xff]
    %v244 = vld [vmem:[%s1 + $0x68] sm:$0xff]
    %v245 = vld [vmem:[%s1 + $0x70] sm:$0xff]
    %v246 = vld [vmem:[%s1 + $0x78] sm:$0xff]
    %v247 = vmul.f32 %v149, %v231
    %v248 = vmul.f32 %v151, %v232
    %v249 = vmul.f32 %v170, %v233
    %v250 = vmul.f32 %v172, %v234
    %v251 = vmul.f32 %v176, %v235
    %v252 = vmul.f32 %v178, %v236
    %v253 = vmul.f32 %v182, %v237
    %v254 = vmul.f32 %v184, %v238
    %v255 = vmul.f32 %v188, %v239
    %v256 = vmul.f32 %v190, %v240
    %v257 = vmul.f32 %v194, %v241
    %v258 = vmul.f32 %v196, %v242
    %v259 = vmul.f32 %v200, %v243
    %v260 = vmul.f32 %v202, %v244
    %v261 = vmul.f32 %v206, %v245
    %v262 = vmul.f32 %v208, %v246
    %vm263 = vcmask 1047680
    %264 = vrot.lane.b32.xlu0 %v149, 16
    %v265 = vpop.permute.xlu0 %264
    %v266 = vsel %vm263, %v265, %v149
    %267 = vrot.lane.b32.xlu0 %v151, 16
    %v268 = vpop.permute.xlu0 %267
    %v269 = vsel %vm263, %v268, %v151
    %270 = vrot.lane.b32.xlu0 %v170, 16
    %v271 = vpop.permute.xlu0 %270
    %v272 = vsel %vm263, %v271, %v170
    %273 = vrot.lane.b32.xlu0 %v172, 16
    %v274 = vpop.permute.xlu0 %273
    %v275 = vsel %vm263, %v274, %v172
    %276 = vrot.lane.b32.xlu0 %v176, 16
    %v277 = vpop.permute.xlu0 %276
    %v278 = vsel %vm263, %v277, %v176
    %279 = vrot.lane.b32.xlu0 %v178, 16
    %v280 = vpop.permute.xlu0 %279
    %v281 = vsel %vm263, %v280, %v178
    %282 = vrot.lane.b32.xlu0 %v182, 16
    %v283 = vpop.permute.xlu0 %282
    %v284 = vsel %vm263, %v283, %v182
    %285 = vrot.lane.b32.xlu0 %v184, 16
    %v286 = vpop.permute.xlu0 %285
    %v287 = vsel %vm263, %v286, %v184
    %288 = vrot.lane.b32.xlu0 %v188, 16
    %v289 = vpop.permute.xlu0 %288
    %v290 = vsel %vm263, %v289, %v188
    %291 = vrot.lane.b32.xlu0 %v190, 16
    %v292 = vpop.permute.xlu0 %291
    %v293 = vsel %vm263, %v292, %v190
    %294 = vrot.lane.b32.xlu0 %v194, 16
    %v295 = vpop.permute.xlu0 %294
    %v296 = vsel %vm263, %v295, %v194
    %297 = vrot.lane.b32.xlu0 %v196, 16
    %v298 = vpop.permute.xlu0 %297
    %v299 = vsel %vm263, %v298, %v196
    %300 = vrot.lane.b32.xlu0 %v200, 16
    %v301 = vpop.permute.xlu0 %300
    %v302 = vsel %vm263, %v301, %v200
    %303 = vrot.lane.b32.xlu0 %v202, 16
    %v304 = vpop.permute.xlu0 %303
    %v305 = vsel %vm263, %v304, %v202
    %306 = vrot.lane.b32.xlu0 %v206, 16
    %v307 = vpop.permute.xlu0 %306
    %v308 = vsel %vm263, %v307, %v206
    %309 = vrot.lane.b32.xlu0 %v208, 16
    %v310 = vpop.permute.xlu0 %309
    %v311 = vsel %vm263, %v310, %v208
    %312 = vrot.lane.b32.xlu0 %v266, 16
    %v313 = vpop.permute.xlu0 %312
    %314 = vrot.lane.b32.xlu0 %v269, 16
    %v315 = vpop.permute.xlu0 %314
    %316 = vrot.lane.b32.xlu0 %v272, 16
    %v317 = vpop.permute.xlu0 %316
    %318 = vrot.lane.b32.xlu0 %v275, 16
    %v319 = vpop.permute.xlu0 %318
    %320 = vrot.lane.b32.xlu0 %v278, 16
    %v321 = vpop.permute.xlu0 %320
    %322 = vrot.lane.b32.xlu0 %v281, 16
    %v323 = vpop.permute.xlu0 %322
    %324 = vrot.lane.b32.xlu0 %v284, 16
    %v325 = vpop.permute.xlu0 %324
    %326 = vrot.lane.b32.xlu0 %v287, 16
    %v327 = vpop.permute.xlu0 %326
    %328 = vrot.lane.b32.xlu0 %v290, 16
    %v329 = vpop.permute.xlu0 %328
    %330 = vrot.lane.b32.xlu0 %v293, 16
    %v331 = vpop.permute.xlu0 %330
    %332 = vrot.lane.b32.xlu0 %v296, 16
    %v333 = vpop.permute.xlu0 %332
    %334 = vrot.lane.b32.xlu0 %v299, 16
    %v335 = vpop.permute.xlu0 %334
    %336 = vrot.lane.b32.xlu0 %v302, 16
    %v337 = vpop.permute.xlu0 %336
    %338 = vrot.lane.b32.xlu0 %v305, 16
    %v339 = vpop.permute.xlu0 %338
    %340 = vrot.lane.b32.xlu0 %v308, 16
    %v341 = vpop.permute.xlu0 %340
    %342 = vrot.lane.b32.xlu0 %v311, 16
    %v343 = vpop.permute.xlu0 %342
    %v344 = vsel %vm263, %v313, %v149
    %v345 = vsel %vm263, %v315, %v151
    %v346 = vsel %vm263, %v317, %v170
    %v347 = vsel %vm263, %v319, %v172
    %v348 = vsel %vm263, %v321, %v176
    %v349 = vsel %vm263, %v323, %v178
    %v350 = vsel %vm263, %v325, %v182
    %v351 = vsel %vm263, %v327, %v184
    %v352 = vsel %vm263, %v329, %v188
    %v353 = vsel %vm263, %v331, %v190
    %v354 = vsel %vm263, %v333, %v194
    %v355 = vsel %vm263, %v335, %v196
    %v356 = vsel %vm263, %v337, %v200
    %v357 = vsel %vm263, %v339, %v202
    %v358 = vsel %vm263, %v341, %v206
    %v359 = vsel %vm263, %v343, %v208
    %v360 = vld [vmem:[%s2] sm:$0xff]
    %v361 = vld [vmem:[%s2 + $0x8] sm:$0xff]
    %v362 = vld [vmem:[%s2 + $0x10] sm:$0xff]
    %v363 = vld [vmem:[%s2 + $0x18] sm:$0xff]
    %v364 = vld [vmem:[%s2 + $0x20] sm:$0xff]
    %v365 = vld [vmem:[%s2 + $0x28] sm:$0xff]
    %v366 = vld [vmem:[%s2 + $0x30] sm:$0xff]
    %v367 = vld [vmem:[%s2 + $0x38] sm:$0xff]
    %v368 = vld [vmem:[%s2 + $0x40] sm:$0xff]
    %v369 = vld [vmem:[%s2 + $0x48] sm:$0xff]
    %v370 = vld [vmem:[%s2 + $0x50] sm:$0xff]
    %v371 = vld [vmem:[%s2 + $0x58] sm:$0xff]
    %v372 = vld [vmem:[%s2 + $0x60] sm:$0xff]
    %v373 = vld [vmem:[%s2 + $0x68] sm:$0xff]
    %v374 = vld [vmem:[%s2 + $0x70] sm:$0xff]
    %v375 = vld [vmem:[%s2 + $0x78] sm:$0xff]
    %392 = vrot.lane.b32.xlu0 %v360, 8
    %v393 = vpop.permute.xlu0 %392
    %394 = vrot.lane.b32.xlu0 %v361, 8
    %v395 = vpop.permute.xlu0 %394
    %396 = vrot.lane.b32.xlu0 %v362, 8
    %v397 = vpop.permute.xlu0 %396
    %398 = vrot.lane.b32.xlu0 %v363, 8
    %v399 = vpop.permute.xlu0 %398
    %400 = vrot.lane.b32.xlu0 %v364, 8
    %v401 = vpop.permute.xlu0 %400
    %402 = vrot.lane.b32.xlu0 %v365, 8
    %v403 = vpop.permute.xlu0 %402
    %404 = vrot.lane.b32.xlu0 %v366, 8
    %v405 = vpop.permute.xlu0 %404
    %406 = vrot.lane.b32.xlu0 %v367, 8
    %v407 = vpop.permute.xlu0 %406
    %408 = vrot.lane.b32.xlu0 %v368, 8
    %v409 = vpop.permute.xlu0 %408
    %410 = vrot.lane.b32.xlu0 %v369, 8
    %v411 = vpop.permute.xlu0 %410
    %412 = vrot.lane.b32.xlu0 %v370, 8
    %v413 = vpop.permute.xlu0 %412
    %414 = vrot.lane.b32.xlu0 %v371, 8
    %v415 = vpop.permute.xlu0 %414
    %416 = vrot.lane.b32.xlu0 %v372, 8
    %v417 = vpop.permute.xlu0 %416
    %418 = vrot.lane.b32.xlu0 %v373, 8
    %v419 = vpop.permute.xlu0 %418
    %420 = vrot.lane.b32.xlu0 %v374, 8
    %v421 = vpop.permute.xlu0 %420
    %422 = vrot.lane.b32.xlu0 %v375, 8
    %v423 = vpop.permute.xlu0 %422
    %v440 = vmul.f32 %v344, %v393
    %v441 = vmul.f32 %v345, %v395
    %v442 = vmul.f32 %v346, %v397
    %v443 = vmul.f32 %v347, %v399
    %v444 = vmul.f32 %v348, %v401
    %v445 = vmul.f32 %v349, %v403
    %v446 = vmul.f32 %v350, %v405
    %v447 = vmul.f32 %v351, %v407
    %v448 = vmul.f32 %v352, %v409
    %v449 = vmul.f32 %v353, %v411
    %v450 = vmul.f32 %v354, %v413
    %v451 = vmul.f32 %v355, %v415
    %v452 = vmul.f32 %v356, %v417
    %v453 = vmul.f32 %v357, %v419
    %v454 = vmul.f32 %v358, %v421
    %v455 = vmul.f32 %v359, %v423
    %472 = vrot.lane.b32.xlu0 %v440, 120
    %v473 = vpop.permute.xlu0 %472
    %474 = vrot.lane.b32.xlu0 %v441, 120
    %v475 = vpop.permute.xlu0 %474
    %476 = vrot.lane.b32.xlu0 %v442, 120
    %v477 = vpop.permute.xlu0 %476
    %478 = vrot.lane.b32.xlu0 %v443, 120
    %v479 = vpop.permute.xlu0 %478
    %480 = vrot.lane.b32.xlu0 %v444, 120
    %v481 = vpop.permute.xlu0 %480
    %482 = vrot.lane.b32.xlu0 %v445, 120
    %v483 = vpop.permute.xlu0 %482
    %484 = vrot.lane.b32.xlu0 %v446, 120
    %v485 = vpop.permute.xlu0 %484
    %486 = vrot.lane.b32.xlu0 %v447, 120
    %v487 = vpop.permute.xlu0 %486
    %488 = vrot.lane.b32.xlu0 %v448, 120
    %v489 = vpop.permute.xlu0 %488
    %490 = vrot.lane.b32.xlu0 %v449, 120
    %v491 = vpop.permute.xlu0 %490
    %492 = vrot.lane.b32.xlu0 %v450, 120
    %v493 = vpop.permute.xlu0 %492
    %494 = vrot.lane.b32.xlu0 %v451, 120
    %v495 = vpop.permute.xlu0 %494
    %496 = vrot.lane.b32.xlu0 %v452, 120
    %v497 = vpop.permute.xlu0 %496
    %498 = vrot.lane.b32.xlu0 %v453, 120
    %v499 = vpop.permute.xlu0 %498
    %500 = vrot.lane.b32.xlu0 %v454, 120
    %v501 = vpop.permute.xlu0 %500
    %502 = vrot.lane.b32.xlu0 %v455, 120
    %v503 = vpop.permute.xlu0 %502
    %v520 = vadd.f32 %v247, %v473
    %v521 = vadd.f32 %v248, %v475
    %v522 = vadd.f32 %v249, %v477
    %v523 = vadd.f32 %v250, %v479
    %v524 = vadd.f32 %v251, %v481
    %v525 = vadd.f32 %v252, %v483
    %v526 = vadd.f32 %v253, %v485
    %v527 = vadd.f32 %v254, %v487
    %v528 = vadd.f32 %v255, %v489
    %v529 = vadd.f32 %v256, %v491
    %v530 = vadd.f32 %v257, %v493
    %v531 = vadd.f32 %v258, %v495
    %v532 = vadd.f32 %v259, %v497
    %v533 = vadd.f32 %v260, %v499
    %v534 = vadd.f32 %v261, %v501
    %v535 = vadd.f32 %v262, %v503
    %v536 = vpack.c.bf16 %v521, %v520
    %v537 = vpack.c.bf16 %v523, %v522
    %v538 = vpack.c.bf16 %v525, %v524
    %v539 = vpack.c.bf16 %v527, %v526
    %v540 = vpack.c.bf16 %v529, %v528
    %v541 = vpack.c.bf16 %v531, %v530
    %v542 = vpack.c.bf16 %v533, %v532
    %v543 = vpack.c.bf16 %v535, %v534
    %vm544 = vcmask 130048
    %v546 = vsel %vm544, %v536, 0
    %v549 = vsel %vm544, %v537, 0
    %v552 = vsel %vm544, %v538, 0
    %v555 = vsel %vm544, %v539, 0
    %v558 = vsel %vm544, %v540, 0
    %v561 = vsel %vm544, %v541, 0
    %v564 = vsel %vm544, %v542, 0
    %v567 = vsel %vm544, %v543, 0
    %569 = vmatpush.bf16.xpose.msra.mxu0 0
    %570 = vmatpush.bf16.xpose.msra.mxu0 0
    %571 = vmatpush.bf16.xpose.msra.mxu0 0
    %572 = vmatpush.bf16.xpose.msra.mxu0 0
    %573 = vmatpush.bf16.xpose.msra.mxu0 %v567
    %574 = vmatpush.bf16.xpose.msra.mxu0 %v564
    %575 = vmatpush.bf16.xpose.msra.mxu0 %v561
    %576 = vmatpush.bf16.xpose.msra.mxu0 %v558
    %577 = vmatmul.bf16.gmra.mxu0 %v546
    %v578 = vpop.f32.mrf.mxu0
    %v579 = vadd.f32 0.0, %v578
    %v580 = vpop.f32.mrf.mxu0
    %v581 = vadd.f32 0.0, %v580
    %582 = vmatmul.bf16.gmra.mxu0 %v549
    %v583 = vpop.f32.mrf.mxu0
    %v584 = vadd.f32 0.0, %v583
    %v585 = vpop.f32.mrf.mxu0
    %v586 = vadd.f32 0.0, %v585
    %587 = vmatmul.bf16.gmra.mxu0 %v552
    %v588 = vpop.f32.mrf.mxu0
    %v589 = vadd.f32 0.0, %v588
    %v590 = vpop.f32.mrf.mxu0
    %v591 = vadd.f32 0.0, %v590
    %592 = vmatmul.bf16.gmra.mxu0 %v555
    %v593 = vpop.f32.mrf.mxu0
    %v594 = vadd.f32 0.0, %v593
    %v595 = vpop.f32.mrf.mxu0
    %v596 = vadd.f32 0.0, %v595
    %597 = vdwg.mxu0
    %v598 = vmul.f32 %v579, 0.25
    %v599 = vmul.f32 %v581, 0.25
    %v600 = vmul.f32 %v584, 0.25
    %v601 = vmul.f32 %v586, 0.25
    %v602 = vmul.f32 %v589, 0.25
    %v603 = vmul.f32 %v591, 0.25
    %v604 = vmul.f32 %v594, 0.25
    %v605 = vmul.f32 %v596, 0.25
    %v606 = vld [vmem:[%s3] sm:$0xff]
    %v607 = vld [vmem:[%s3 + $0x8] sm:$0xff]
    %v608 = vld [vmem:[%s3 + $0x10] sm:$0xff]
    %v609 = vld [vmem:[%s3 + $0x18] sm:$0xff]
    %v610 = vld [vmem:[%s3 + $0x20] sm:$0xff]
    %v611 = vld [vmem:[%s3 + $0x28] sm:$0xff]
    %v612 = vld [vmem:[%s3 + $0x30] sm:$0xff]
    %v613 = vld [vmem:[%s3 + $0x38] sm:$0xff]
    %v614 = vadd.f32 %v598, %v606
    %v615 = vadd.f32 %v599, %v607
    %v616 = vadd.f32 %v600, %v608
    %v617 = vadd.f32 %v601, %v609
    %v618 = vadd.f32 %v602, %v610
    %v619 = vadd.f32 %v603, %v611
    %v620 = vadd.f32 %v604, %v612
    %v621 = vadd.f32 %v605, %v613
    %v622 = vsel %vm42, %v614, -inf
    %623 = vmax.xlane.f32.xlu0 %v622
    %v624 = vpop.xlane.xlu0 %623
    %v625 = vsel %vm42, %v615, -inf
    %626 = vmax.xlane.f32.xlu0 %v625
    %v627 = vpop.xlane.xlu0 %626
    %v628 = vsel %vm42, %v616, -inf
    %629 = vmax.xlane.f32.xlu0 %v628
    %v630 = vpop.xlane.xlu0 %629
    %v631 = vsel %vm42, %v617, -inf
    %632 = vmax.xlane.f32.xlu0 %v631
    %v633 = vpop.xlane.xlu0 %632
    %v634 = vsel %vm42, %v618, -inf
    %635 = vmax.xlane.f32.xlu0 %v634
    %v636 = vpop.xlane.xlu0 %635
    %v637 = vsel %vm42, %v619, -inf
    %638 = vmax.xlane.f32.xlu0 %v637
    %v639 = vpop.xlane.xlu0 %638
    %v640 = vsel %vm42, %v620, -inf
    %641 = vmax.xlane.f32.xlu0 %v640
    %v642 = vpop.xlane.xlu0 %641
    %v643 = vsel %vm42, %v621, -inf
    %644 = vmax.xlane.f32.xlu0 %v643
    %v645 = vpop.xlane.xlu0 %644
    %v646 = vsub.f32 %v614, %v624
    %v647 = vsub.f32 %v615, %v627
    %v648 = vsub.f32 %v616, %v630
    %v649 = vsub.f32 %v617, %v633
    %v650 = vsub.f32 %v618, %v636
    %v651 = vsub.f32 %v619, %v639
    %v652 = vsub.f32 %v620, %v642
    %v653 = vsub.f32 %v621, %v645
    %v654 = vmul.f32 %v646, 1.442695
    %v655 = vpow.pop %v654
    %v656 = vmul.f32 %v647, 1.442695
    %v657 = vpow.pop %v656
    %v658 = vmul.f32 %v648, 1.442695
    %v659 = vpow.pop %v658
    %v660 = vmul.f32 %v649, 1.442695
    %v661 = vpow.pop %v660
    %v662 = vmul.f32 %v650, 1.442695
    %v663 = vpow.pop %v662
    %v664 = vmul.f32 %v651, 1.442695
    %v665 = vpow.pop %v664
    %v666 = vmul.f32 %v652, 1.442695
    %v667 = vpow.pop %v666
    %v668 = vmul.f32 %v653, 1.442695
    %v669 = vpow.pop %v668
    %v670 = vsel %vm42, %v655, 0.0
    %671 = vadd.xlane.f32.xlu0 %v670
    %v672 = vpop.xlane.xlu0 %671
    %v673 = vsel %vm42, %v657, 0.0
    %674 = vadd.xlane.f32.xlu0 %v673
    %v675 = vpop.xlane.xlu0 %674
    %v676 = vsel %vm42, %v659, 0.0
    %677 = vadd.xlane.f32.xlu0 %v676
    %v678 = vpop.xlane.xlu0 %677
    %v679 = vsel %vm42, %v661, 0.0
    %680 = vadd.xlane.f32.xlu0 %v679
    %v681 = vpop.xlane.xlu0 %680
    %v682 = vsel %vm42, %v663, 0.0
    %683 = vadd.xlane.f32.xlu0 %v682
    %v684 = vpop.xlane.xlu0 %683
    %v685 = vsel %vm42, %v665, 0.0
    %686 = vadd.xlane.f32.xlu0 %v685
    %v687 = vpop.xlane.xlu0 %686
    %v688 = vsel %vm42, %v667, 0.0
    %689 = vadd.xlane.f32.xlu0 %v688
    %v690 = vpop.xlane.xlu0 %689
    %v691 = vsel %vm42, %v669, 0.0
    %692 = vadd.xlane.f32.xlu0 %v691
    %v693 = vpop.xlane.xlu0 %692
    %v694 = vrcp.pop %v672
    %v695 = vrcp.pop %v675
    %v696 = vrcp.pop %v678
    %v697 = vrcp.pop %v681
    %v698 = vrcp.pop %v684
    %v699 = vrcp.pop %v687
    %v700 = vrcp.pop %v690
    %v701 = vrcp.pop %v693
    %v702 = vmul.f32 %v655, %v694
    %v703 = vmul.f32 %v657, %v695
    %v704 = vmul.f32 %v659, %v696
    %v705 = vmul.f32 %v661, %v697
    %v706 = vmul.f32 %v663, %v698
    %v707 = vmul.f32 %v665, %v699
    %v708 = vmul.f32 %v667, %v700
    %v709 = vmul.f32 %v669, %v701
    %v710 = vpack.c.bf16 %v703, %v702
    %v711 = vpack.c.bf16 %v705, %v704
    %v712 = vpack.c.bf16 %v707, %v706
    %v713 = vpack.c.bf16 %v709, %v708
    %v714 = vpack.c.bf16 %v165, %v163
    %v715 = vpack.c.bf16 %v216, %v214
    %v716 = vpack.c.bf16 %v222, %v220
    %v717 = vpack.c.bf16 %v228, %v226
    %v719 = vsel %vm42, %v710, 0
    %v722 = vsel %vm42, %v711, 0
    %v725 = vsel %vm42, %v712, 0
    %v728 = vsel %vm42, %v713, 0
    %730 = vmatpush.bf16.msra.mxu0 0
    %731 = vmatpush.bf16.msra.mxu0 0
    %732 = vmatpush.bf16.msra.mxu0 0
    %733 = vmatpush.bf16.msra.mxu0 0
    %734 = vmatpush.bf16.msra.mxu0 %v717
    %735 = vmatpush.bf16.msra.mxu0 %v716
    %736 = vmatpush.bf16.msra.mxu0 %v715
    %737 = vmatpush.bf16.msra.mxu0 %v714
    %738 = vmatmul.bf16.gmra.mxu0 %v719
    %v739 = vpop.f32.mrf.mxu0
    %v740 = vadd.f32 0.0, %v739
    %v741 = vpop.f32.mrf.mxu0
    %v742 = vadd.f32 0.0, %v741
    %743 = vmatmul.bf16.gmra.mxu0 %v722
    %v744 = vpop.f32.mrf.mxu0
    %v745 = vadd.f32 0.0, %v744
    %v746 = vpop.f32.mrf.mxu0
    %v747 = vadd.f32 0.0, %v746
    %748 = vmatmul.bf16.gmra.mxu0 %v725
    %v749 = vpop.f32.mrf.mxu0
    %v750 = vadd.f32 0.0, %v749
    %v751 = vpop.f32.mrf.mxu0
    %v752 = vadd.f32 0.0, %v751
    %753 = vmatmul.bf16.gmra.mxu0 %v728
    %v754 = vpop.f32.mrf.mxu0
    %v755 = vadd.f32 0.0, %v754
    %v756 = vpop.f32.mrf.mxu0
    %v757 = vadd.f32 0.0, %v756
    %758 = vdwg.mxu0
    %761 = vrot.lane.b32.xlu0 %v745, 16
    %v762 = vpop.permute.xlu0 %761
    %763 = vrot.lane.b32.xlu0 %v747, 16
    %v764 = vpop.permute.xlu0 %763
    %769 = vrot.lane.b32.xlu0 %v750, 32
    %v770 = vpop.permute.xlu0 %769
    %771 = vrot.lane.b32.xlu0 %v752, 32
    %v772 = vpop.permute.xlu0 %771
    %777 = vrot.lane.b32.xlu0 %v755, 48
    %v778 = vpop.permute.xlu0 %777
    %779 = vrot.lane.b32.xlu0 %v757, 48
    %v780 = vpop.permute.xlu0 %779
    %v783 = vsel %vm544, %v740, %v762
    %v784 = vsel %vm544, %v742, %v764
    %vm785 = vcmask 261120
    %v786 = vsel %vm785, %v783, %v770
    %v787 = vsel %vm785, %v784, %v772
    %vm788 = vcmask 392192
    %v789 = vsel %vm788, %v786, %v778
    %v790 = vsel %vm788, %v787, %v780
    %v791 = vpack.c.bf16 %v790, %v789
    %v792 = vld [vmem:[%s5] sm:$0xf]
    %v793 = vld [vmem:[%s5 + $0x4] sm:$0xf]
    %v794 = vld [vmem:[%s5 + $0x8] sm:$0xf]
    %v795 = vld [vmem:[%s5 + $0xc] sm:$0xf]
    %v796 = vld [vmem:[%s5 + $0x10] sm:$0xf]
    %v797 = vld [vmem:[%s5 + $0x14] sm:$0xf]
    %v798 = vld [vmem:[%s5 + $0x18] sm:$0xf]
    %v799 = vld [vmem:[%s5 + $0x1c] sm:$0xf]
    %v808 = vunpack.c.l.b16 %v792
    %v809 = vunpack.c.l.b16 %v793
    %v810 = vunpack.c.l.b16 %v794
    %v811 = vunpack.c.l.b16 %v795
    %v812 = vunpack.c.l.b16 %v796
    %v813 = vunpack.c.l.b16 %v797
    %v814 = vunpack.c.l.b16 %v798
    %v815 = vunpack.c.l.b16 %v799
    %v816 = vpack.c.b16 %v809, %v808
    %v817 = vpack.c.b16 %v811, %v810
    %v818 = vpack.c.b16 %v813, %v812
    %v819 = vpack.c.b16 %v815, %v814
    %v825 = vsel %vm42, %v791, 0
    %827 = vmatpush.bf16.msra.mxu0 0
    %828 = vmatpush.bf16.msra.mxu0 0
    %829 = vmatpush.bf16.msra.mxu0 0
    %830 = vmatpush.bf16.msra.mxu0 0
    %831 = vmatpush.bf16.msra.mxu0 %v819
    %832 = vmatpush.bf16.msra.mxu0 %v818
    %833 = vmatpush.bf16.msra.mxu0 %v817
    %834 = vmatpush.bf16.msra.mxu0 %v816
    %835 = vmatmul.bf16.gmra.mxu0 %v825
    %v836 = vpop.f32.mrf.mxu0
    %v837 = vadd.f32 0.0, %v836
    %v838 = vpop.f32.mrf.mxu0
    %v839 = vadd.f32 0.0, %v838
    %840 = vdwg.mxu0
    %v841 = vadd.f32 %v37, %v837
    %v842 = vadd.f32 %v38, %v839
    %v843 = vld [vmem:[%s7] sm:$0x1]
    %v844 = vmul.f32 %v841, %v841
    %v845 = vmul.f32 %v842, %v842
    %v846 = vsel %vm42, %v844, 0.0
    %847 = vadd.xlane.f32.xlu0 %v846
    %v848 = vpop.xlane.xlu0 %847
    %v849 = vsel %vm42, %v845, 0.0
    %850 = vadd.xlane.f32.xlu0 %v849
    %v851 = vpop.xlane.xlu0 %850
    %v852 = vmul.f32 %v848, %v55
    %v853 = vmul.f32 %v851, %v55
    %v854 = vadd.f32 %v852, 1e-05
    %v855 = vadd.f32 %v853, 1e-05
    %v856 = vrsqrt.pop %v854
    %v857 = vmul.f32 %v856, %v854
    %v858 = vmul.f32 %v857, %v856
    %v859 = vmul.f32 0.5, %v858
    %v860 = vsub.f32 1.5, %v859
    %v861 = vmul.f32 %v856, %v860
    %vm862 = vweird.f32 %v854
    %vm863 = vweird.f32 %v856
    %vm864 = vmor %vm862, %vm863
    %v865 = vsel %vm864, %v856, %v861
    %v866 = vrsqrt.pop %v855
    %v867 = vmul.f32 %v866, %v855
    %v868 = vmul.f32 %v867, %v866
    %v869 = vmul.f32 0.5, %v868
    %v870 = vsub.f32 1.5, %v869
    %v871 = vmul.f32 %v866, %v870
    %vm872 = vweird.f32 %v855
    %vm873 = vweird.f32 %v866
    %vm874 = vmor %vm872, %vm873
    %v875 = vsel %vm874, %v866, %v871
    %v876 = vmul.f32 %v841, %v865
    %v877 = vmul.f32 %v842, %v875
    %v879 = vperm.slane %v843, 0
    %v881 = vmul.f32 %v879, %v876
    %v882 = vmul.f32 %v879, %v877
    %v883 = vpack.c.bf16 %v882, %v881
    %v884 = vld [vmem:[%s8] sm:$0xff]
    %v885 = vld [vmem:[%s8 + $0x8] sm:$0xff]
    %v886 = vld [vmem:[%s8 + $0x10] sm:$0xff]
    %v887 = vld [vmem:[%s8 + $0x18] sm:$0xff]
    %v888 = vld [vmem:[%s8 + $0x20] sm:$0xff]
    %v889 = vld [vmem:[%s8 + $0x28] sm:$0xff]
    %v890 = vld [vmem:[%s8 + $0x30] sm:$0xff]
    %v891 = vld [vmem:[%s8 + $0x38] sm:$0xff]
    %v892 = vld [vmem:[%s8 + $0x40] sm:$0xff]
    %v893 = vld [vmem:[%s8 + $0x48] sm:$0xff]
    %v894 = vld [vmem:[%s8 + $0x50] sm:$0xff]
    %v895 = vld [vmem:[%s8 + $0x58] sm:$0xff]
    %v896 = vld [vmem:[%s8 + $0x60] sm:$0xff]
    %v897 = vld [vmem:[%s8 + $0x68] sm:$0xff]
    %v898 = vld [vmem:[%s8 + $0x70] sm:$0xff]
    %v899 = vld [vmem:[%s8 + $0x78] sm:$0xff]
    %v916 = vunpack.c.l.b16 %v884
    %v917 = vunpack.c.h.b16 %v884
    %v918 = vunpack.c.l.b16 %v885
    %v919 = vunpack.c.h.b16 %v885
    %v920 = vunpack.c.l.b16 %v886
    %v921 = vunpack.c.h.b16 %v886
    %v922 = vunpack.c.l.b16 %v887
    %v923 = vunpack.c.h.b16 %v887
    %v924 = vunpack.c.l.b16 %v888
    %v925 = vunpack.c.h.b16 %v888
    %v926 = vunpack.c.l.b16 %v889
    %v927 = vunpack.c.h.b16 %v889
    %v928 = vunpack.c.l.b16 %v890
    %v929 = vunpack.c.h.b16 %v890
    %v930 = vunpack.c.l.b16 %v891
    %v931 = vunpack.c.h.b16 %v891
    %v932 = vunpack.c.l.b16 %v892
    %v933 = vunpack.c.h.b16 %v892
    %v934 = vunpack.c.l.b16 %v893
    %v935 = vunpack.c.h.b16 %v893
    %v936 = vunpack.c.l.b16 %v894
    %v937 = vunpack.c.h.b16 %v894
    %v938 = vunpack.c.l.b16 %v895
    %v939 = vunpack.c.h.b16 %v895
    %v940 = vunpack.c.l.b16 %v896
    %v941 = vunpack.c.h.b16 %v896
    %v942 = vunpack.c.l.b16 %v897
    %v943 = vunpack.c.h.b16 %v897
    %v944 = vunpack.c.l.b16 %v898
    %v945 = vunpack.c.h.b16 %v898
    %v946 = vunpack.c.l.b16 %v899
    %v947 = vunpack.c.h.b16 %v899
    %v948 = vpack.c.b16 %v920, %v916
    %v949 = vpack.c.b16 %v921, %v917
    %v950 = vpack.c.b16 %v922, %v918
    %v951 = vpack.c.b16 %v923, %v919
    %v952 = vpack.c.b16 %v928, %v924
    %v953 = vpack.c.b16 %v929, %v925
    %v954 = vpack.c.b16 %v930, %v926
    %v955 = vpack.c.b16 %v931, %v927
    %v956 = vpack.c.b16 %v936, %v932
    %v957 = vpack.c.b16 %v937, %v933
    %v958 = vpack.c.b16 %v938, %v934
    %v959 = vpack.c.b16 %v939, %v935
    %v960 = vpack.c.b16 %v944, %v940
    %v961 = vpack.c.b16 %v945, %v941
    %v962 = vpack.c.b16 %v946, %v942
    %v963 = vpack.c.b16 %v947, %v943
    %v981 = vsel %vm42, %v883, 0
    %983 = vmatpush.bf16.msra.mxu0 0
    %984 = vmatpush.bf16.msra.mxu0 0
    %985 = vmatpush.bf16.msra.mxu0 0
    %986 = vmatpush.bf16.msra.mxu0 0
    %987 = vmatpush.bf16.msra.mxu0 %v960
    %988 = vmatpush.bf16.msra.mxu0 %v956
    %989 = vmatpush.bf16.msra.mxu0 %v952
    %990 = vmatpush.bf16.msra.mxu0 %v948
    %991 = vmatmul.bf16.gmra.mxu0 %v981
    %v992 = vpop.f32.mrf.mxu0
    %v993 = vadd.f32 0.0, %v992
    %v994 = vpop.f32.mrf.mxu0
    %v995 = vadd.f32 0.0, %v994
    %996 = vdwg.mxu0
    %997 = vmatpush.bf16.msra.mxu0 0
    %998 = vmatpush.bf16.msra.mxu0 0
    %999 = vmatpush.bf16.msra.mxu0 0
    %1000 = vmatpush.bf16.msra.mxu0 0
    %1001 = vmatpush.bf16.msra.mxu0 %v961
    %1002 = vmatpush.bf16.msra.mxu0 %v957
    %1003 = vmatpush.bf16.msra.mxu0 %v953
    %1004 = vmatpush.bf16.msra.mxu0 %v949
    %1005 = vmatmul.bf16.gmra.mxu0 %v981
    %v1006 = vpop.f32.mrf.mxu0
    %v1007 = vadd.f32 0.0, %v1006
    %v1008 = vpop.f32.mrf.mxu0
    %v1009 = vadd.f32 0.0, %v1008
    %1010 = vdwg.mxu0
    %1011 = vmatpush.bf16.msra.mxu0 0
    %1012 = vmatpush.bf16.msra.mxu0 0
    %1013 = vmatpush.bf16.msra.mxu0 0
    %1014 = vmatpush.bf16.msra.mxu0 0
    %1015 = vmatpush.bf16.msra.mxu0 %v962
    %1016 = vmatpush.bf16.msra.mxu0 %v958
    %1017 = vmatpush.bf16.msra.mxu0 %v954
    %1018 = vmatpush.bf16.msra.mxu0 %v950
    %1019 = vmatmul.bf16.gmra.mxu0 %v981
    %v1020 = vpop.f32.mrf.mxu0
    %v1021 = vadd.f32 0.0, %v1020
    %v1022 = vpop.f32.mrf.mxu0
    %v1023 = vadd.f32 0.0, %v1022
    %1024 = vdwg.mxu0
    %1025 = vmatpush.bf16.msra.mxu0 0
    %1026 = vmatpush.bf16.msra.mxu0 0
    %1027 = vmatpush.bf16.msra.mxu0 0
    %1028 = vmatpush.bf16.msra.mxu0 0
    %1029 = vmatpush.bf16.msra.mxu0 %v963
    %1030 = vmatpush.bf16.msra.mxu0 %v959
    %1031 = vmatpush.bf16.msra.mxu0 %v955
    %1032 = vmatpush.bf16.msra.mxu0 %v951
    %1033 = vmatmul.bf16.gmra.mxu0 %v981
    %v1034 = vpop.f32.mrf.mxu0
    %v1035 = vadd.f32 0.0, %v1034
    %v1036 = vpop.f32.mrf.mxu0
    %v1037 = vadd.f32 0.0, %v1036
    %1038 = vdwg.mxu0
    %v1039 = vxor.u32 %v993, 2147483648
    %v1040 = vxor.u32 %v1007, 2147483648
    %v1041 = vxor.u32 %v995, 2147483648
    %v1042 = vxor.u32 %v1009, 2147483648
    %v1043 = vmul.f32 %v1039, 1.442695
    %v1044 = vpow.pop %v1043
    %v1045 = vmul.f32 %v1040, 1.442695
    %v1046 = vpow.pop %v1045
    %v1047 = vmul.f32 %v1041, 1.442695
    %v1048 = vpow.pop %v1047
    %v1049 = vmul.f32 %v1042, 1.442695
    %v1050 = vpow.pop %v1049
    %v1051 = vadd.f32 %v1044, 1.0
    %v1052 = vadd.f32 %v1046, 1.0
    %v1053 = vadd.f32 %v1048, 1.0
    %v1054 = vadd.f32 %v1050, 1.0
    %v1055 = vrcp.pop %v1051
    %v1056 = vmul.f32 %v1051, %v1055
    %v1057 = vsub.f32 1.0, %v1056
    %v1058 = vmul.f32 %v1055, %v1057
    %v1059 = vadd.f32 %v1055, %v1058
    %vm1060 = vweird.f32 %v1051
    %vm1061 = vweird.f32 %v1055
    %vm1062 = vmor %vm1060, %vm1061
    %v1063 = vsel %vm1062, %v1055, %v1059
    %v1064 = vand.u32 2147483647, %v1051
    %vm1065 = vcmp.eq.f32.partialorder %v1064, 8.507059e+37
    %v1066 = vand.u32 %v1051, 2147483648
    %v1067 = vor.u32 1.1754944e-38, %v1066
    %v1068 = vsel %vm1065, %v1067, %v1063
    %v1069 = vmul.f32 1.0, %v1068
    %v1070 = vrcp.pop %v1052
    %v1071 = vmul.f32 %v1052, %v1070
    %v1072 = vsub.f32 1.0, %v1071
    %v1073 = vmul.f32 %v1070, %v1072
    %v1074 = vadd.f32 %v1070, %v1073
    %vm1075 = vweird.f32 %v1052
    %vm1076 = vweird.f32 %v1070
    %vm1077 = vmor %vm1075, %vm1076
    %v1078 = vsel %vm1077, %v1070, %v1074
    %v1079 = vand.u32 2147483647, %v1052
    %vm1080 = vcmp.eq.f32.partialorder %v1079, 8.507059e+37
    %v1081 = vand.u32 %v1052, 2147483648
    %v1082 = vor.u32 1.1754944e-38, %v1081
    %v1083 = vsel %vm1080, %v1082, %v1078
    %v1084 = vmul.f32 1.0, %v1083
    %v1085 = vrcp.pop %v1053
    %v1086 = vmul.f32 %v1053, %v1085
    %v1087 = vsub.f32 1.0, %v1086
    %v1088 = vmul.f32 %v1085, %v1087
    %v1089 = vadd.f32 %v1085, %v1088
    %vm1090 = vweird.f32 %v1053
    %vm1091 = vweird.f32 %v1085
    %vm1092 = vmor %vm1090, %vm1091
    %v1093 = vsel %vm1092, %v1085, %v1089
    %v1094 = vand.u32 2147483647, %v1053
    %vm1095 = vcmp.eq.f32.partialorder %v1094, 8.507059e+37
    %v1096 = vand.u32 %v1053, 2147483648
    %v1097 = vor.u32 1.1754944e-38, %v1096
    %v1098 = vsel %vm1095, %v1097, %v1093
    %v1099 = vmul.f32 1.0, %v1098
    %v1100 = vrcp.pop %v1054
    %v1101 = vmul.f32 %v1054, %v1100
    %v1102 = vsub.f32 1.0, %v1101
    %v1103 = vmul.f32 %v1100, %v1102
    %v1104 = vadd.f32 %v1100, %v1103
    %vm1105 = vweird.f32 %v1054
    %vm1106 = vweird.f32 %v1100
    %vm1107 = vmor %vm1105, %vm1106
    %v1108 = vsel %vm1107, %v1100, %v1104
    %v1109 = vand.u32 2147483647, %v1054
    %vm1110 = vcmp.eq.f32.partialorder %v1109, 8.507059e+37
    %v1111 = vand.u32 %v1054, 2147483648
    %v1112 = vor.u32 1.1754944e-38, %v1111
    %v1113 = vsel %vm1110, %v1112, %v1108
    %v1114 = vmul.f32 1.0, %v1113
    %v1115 = vmul.f32 %v993, %v1069
    %v1116 = vmul.f32 %v1007, %v1084
    %v1117 = vmul.f32 %v995, %v1099
    %v1118 = vmul.f32 %v1009, %v1114
    %v1119 = vmul.f32 %v1115, %v1021
    %v1120 = vmul.f32 %v1116, %v1035
    %v1121 = vmul.f32 %v1117, %v1023
    %v1122 = vmul.f32 %v1118, %v1037
    %v1123 = vpack.c.bf16 %v1121, %v1119
    %v1124 = vpack.c.bf16 %v1122, %v1120
    %v1125 = vld [vmem:[%s9] sm:$0xf]
    %v1126 = vld [vmem:[%s9 + $0x4] sm:$0xf]
    %v1127 = vld [vmem:[%s9 + $0x8] sm:$0xf]
    %v1128 = vld [vmem:[%s9 + $0xc] sm:$0xf]
    %v1129 = vld [vmem:[%s9 + $0x10] sm:$0xf]
    %v1130 = vld [vmem:[%s9 + $0x14] sm:$0xf]
    %v1131 = vld [vmem:[%s9 + $0x18] sm:$0xf]
    %v1132 = vld [vmem:[%s9 + $0x1c] sm:$0xf]
    %v1133 = vld [vmem:[%s9 + $0x20] sm:$0xf]
    %v1134 = vld [vmem:[%s9 + $0x24] sm:$0xf]
    %v1135 = vld [vmem:[%s9 + $0x28] sm:$0xf]
    %v1136 = vld [vmem:[%s9 + $0x2c] sm:$0xf]
    %v1137 = vld [vmem:[%s9 + $0x30] sm:$0xf]
    %v1138 = vld [vmem:[%s9 + $0x34] sm:$0xf]
    %v1139 = vld [vmem:[%s9 + $0x38] sm:$0xf]
    %v1140 = vld [vmem:[%s9 + $0x3c] sm:$0xf]
    %v1141 = vld [vmem:[%s9 + $0x40] sm:$0xf]
    %v1142 = vld [vmem:[%s9 + $0x44] sm:$0xf]
    %v1143 = vld [vmem:[%s9 + $0x48] sm:$0xf]
    %v1144 = vld [vmem:[%s9 + $0x4c] sm:$0xf]
    %v1145 = vld [vmem:[%s9 + $0x50] sm:$0xf]
    %v1146 = vld [vmem:[%s9 + $0x54] sm:$0xf]
    %v1147 = vld [vmem:[%s9 + $0x58] sm:$0xf]
    %v1148 = vld [vmem:[%s9 + $0x5c] sm:$0xf]
    %v1149 = vld [vmem:[%s9 + $0x60] sm:$0xf]
    %v1150 = vld [vmem:[%s9 + $0x64] sm:$0xf]
    %v1151 = vld [vmem:[%s9 + $0x68] sm:$0xf]
    %v1152 = vld [vmem:[%s9 + $0x6c] sm:$0xf]
    %v1153 = vld [vmem:[%s9 + $0x70] sm:$0xf]
    %v1154 = vld [vmem:[%s9 + $0x74] sm:$0xf]
    %v1155 = vld [vmem:[%s9 + $0x78] sm:$0xf]
    %v1156 = vld [vmem:[%s9 + $0x7c] sm:$0xf]
    %v1189 = vunpack.c.l.b16 %v1125
    %v1190 = vunpack.c.l.b16 %v1126
    %v1191 = vunpack.c.l.b16 %v1127
    %v1192 = vunpack.c.l.b16 %v1128
    %v1193 = vunpack.c.l.b16 %v1129
    %v1194 = vunpack.c.l.b16 %v1130
    %v1195 = vunpack.c.l.b16 %v1131
    %v1196 = vunpack.c.l.b16 %v1132
    %v1197 = vunpack.c.l.b16 %v1133
    %v1198 = vunpack.c.l.b16 %v1134
    %v1199 = vunpack.c.l.b16 %v1135
    %v1200 = vunpack.c.l.b16 %v1136
    %v1201 = vunpack.c.l.b16 %v1137
    %v1202 = vunpack.c.l.b16 %v1138
    %v1203 = vunpack.c.l.b16 %v1139
    %v1204 = vunpack.c.l.b16 %v1140
    %v1205 = vunpack.c.l.b16 %v1141
    %v1206 = vunpack.c.l.b16 %v1142
    %v1207 = vunpack.c.l.b16 %v1143
    %v1208 = vunpack.c.l.b16 %v1144
    %v1209 = vunpack.c.l.b16 %v1145
    %v1210 = vunpack.c.l.b16 %v1146
    %v1211 = vunpack.c.l.b16 %v1147
    %v1212 = vunpack.c.l.b16 %v1148
    %v1213 = vunpack.c.l.b16 %v1149
    %v1214 = vunpack.c.l.b16 %v1150
    %v1215 = vunpack.c.l.b16 %v1151
    %v1216 = vunpack.c.l.b16 %v1152
    %v1217 = vunpack.c.l.b16 %v1153
    %v1218 = vunpack.c.l.b16 %v1154
    %v1219 = vunpack.c.l.b16 %v1155
    %v1220 = vunpack.c.l.b16 %v1156
    %v1221 = vpack.c.b16 %v1190, %v1189
    %v1222 = vpack.c.b16 %v1192, %v1191
    %v1223 = vpack.c.b16 %v1194, %v1193
    %v1224 = vpack.c.b16 %v1196, %v1195
    %v1225 = vpack.c.b16 %v1198, %v1197
    %v1226 = vpack.c.b16 %v1200, %v1199
    %v1227 = vpack.c.b16 %v1202, %v1201
    %v1228 = vpack.c.b16 %v1204, %v1203
    %v1229 = vpack.c.b16 %v1206, %v1205
    %v1230 = vpack.c.b16 %v1208, %v1207
    %v1231 = vpack.c.b16 %v1210, %v1209
    %v1232 = vpack.c.b16 %v1212, %v1211
    %v1233 = vpack.c.b16 %v1214, %v1213
    %v1234 = vpack.c.b16 %v1216, %v1215
    %v1235 = vpack.c.b16 %v1218, %v1217
    %v1236 = vpack.c.b16 %v1220, %v1219
    %1253 = vmatpush.bf16.msra.mxu0 %v1228
    %1254 = vmatpush.bf16.msra.mxu0 %v1227
    %1255 = vmatpush.bf16.msra.mxu0 %v1226
    %1256 = vmatpush.bf16.msra.mxu0 %v1225
    %1257 = vmatpush.bf16.msra.mxu0 %v1224
    %1258 = vmatpush.bf16.msra.mxu0 %v1223
    %1259 = vmatpush.bf16.msra.mxu0 %v1222
    %1260 = vmatpush.bf16.msra.mxu0 %v1221
    %1261 = vmatmul.bf16.gmra.mxu0 %v1123
    %v1262 = vpop.f32.mrf.mxu0
    %v1263 = vadd.f32 0.0, %v1262
    %v1264 = vpop.f32.mrf.mxu0
    %v1265 = vadd.f32 0.0, %v1264
    %1266 = vdwg.mxu0
    %1267 = vmatpush.bf16.msra.mxu0 %v1236
    %1268 = vmatpush.bf16.msra.mxu0 %v1235
    %1269 = vmatpush.bf16.msra.mxu0 %v1234
    %1270 = vmatpush.bf16.msra.mxu0 %v1233
    %1271 = vmatpush.bf16.msra.mxu0 %v1232
    %1272 = vmatpush.bf16.msra.mxu0 %v1231
    %1273 = vmatpush.bf16.msra.mxu0 %v1230
    %1274 = vmatpush.bf16.msra.mxu0 %v1229
    %1275 = vmatmul.bf16.gmra.mxu0 %v1124
    %v1276 = vpop.f32.mrf.mxu0
    %v1277 = vadd.f32 %v1263, %v1276
    %v1278 = vpop.f32.mrf.mxu0
    %v1279 = vadd.f32 %v1265, %v1278
    %1280 = vdwg.mxu0
    %v1281 = vadd.f32 %v841, %v1277
    %v1282 = vadd.f32 %v842, %v1279
    %1283 = vst.msk [vmem:[#allocation2] sm:$0xff] %vm42, %v1281
    %1284 = vst.msk [vmem:[#allocation2 + $0x8] sm:$0xff] %vm42, %v1282
    // Predicated region
    $region42: #{tpu_custom_call.1} parent=1 // pred_check
      _
    $region43: #{tpu_custom_call.1} parent=1 // pred_check_branch
      %1286 = sbr.rel (0) target = $region45
    $region44: #{tpu_custom_call.1} parent=1 // pred_region
      %1288 = vsyncadd [#allocation3], 0
      %s1289 = sshll.u32 [#allocation2], 4
      %s1290 = int_to_ptr.vmem [resolvable:$true] %s1289
      %s1291 = sshll.u32 %s10, 4
      %s1292 = int_to_ptr.hbm [resolvable:$true] %s1291
      %1297 = dma.vmem_to_hbm [thread:$0]  %s1290, 256, %s1292, [#allocation3], 128, 128, 8
    $region45: #{tpu_custom_call.1} parent=1 // pred_fallthru
      _
    // Predicated region
    $region46: #{tpu_custom_call.1} parent=1 // pred_check
      _
    $region47: #{tpu_custom_call.1} parent=1 // pred_check_branch
      %1299 = sbr.rel (0) target = $region49
    $region48: #{tpu_custom_call.1} parent=1 // pred_region
      %1301 = dma.done [#allocation3], 256
    $region49: #{tpu_custom_call.1} parent=1 // pred_fallthru
      _
    %1302 = vsyncpa [#allocation3], 1

</llo_original>
